<compile_context>
chip_gen: v7x
topology: tpu7x:2x2x1
jax: 0.10.0
libtpu: 0.0.40
codegen_flags: <defaults>
</compile_context>

<pallas_src>
import numpy as np
import jax
import jax.numpy as jnp
from jax.experimental import pallas as pl
from jax.experimental.pallas import tpu as pltpu


def _make_affinity_loss_kernel(N, M, tile_n):
    inv_nm = 1.0 / float(N * M)

    def kernel(pred_ref, gt_ref, out_ref, scal_acc, col_gt_acc, col_exp_acc, p_row0_ref):
        step = pl.program_id(0)
        last = pl.num_programs(0) - 1

        p = pred_ref[...].astype(jnp.float32)          # (tile_n, M) probabilities in (0, 1)
        g = gt_ref[...].astype(jnp.float32)            # (tile_n, M) binary ground truth

        ones_m = jnp.ones((M, 1), jnp.float32)         # lane-axis reducer (runs on MXU)
        ones_n = jnp.ones((1, tile_n), jnp.float32)    # sublane-axis reducer (runs on MXU)

        # ---- BCE partial: -(g*log p + (1-g)*log(1-p)), logs clamped at -100 (nn.BCELoss).
        log_p = jnp.maximum(jnp.log(p), -100.0)
        log_1p = jnp.maximum(jnp.log(1.0 - p), -100.0)
        bce_elem = -(log_1p + g * (log_p - log_1p))
        bce_part = jnp.sum(jnp.dot(bce_elem, ones_m, preferred_element_type=jnp.float32))

        # ---- Single shared exp; p in (0,1) so no max-shift is needed for the LSEs.
        e = jnp.exp(p)

        # ---- Row CE partial: rows with zero gt row-sum; target index is always 0.
        row_gt_sum = jnp.dot(g, ones_m, preferred_element_type=jnp.float32)    # (tile_n, 1)
        row_mask = (row_gt_sum == 0.0).astype(jnp.float32)
        lse_row = jnp.log(jnp.dot(e, ones_m, preferred_element_type=jnp.float32))
        ce_row = lse_row - p[:, 0:1]
        row_ce_part = jnp.sum(row_mask * ce_row)
        row_cnt_part = jnp.sum(row_mask)

        # ---- Column partials (finalized after the last row tile).
        col_gt_part = jnp.dot(ones_n, g, preferred_element_type=jnp.float32)   # (1, M)
        col_exp_part = jnp.dot(ones_n, e, preferred_element_type=jnp.float32)  # (1, M)

        @pl.when(step == 0)
        def _init():
            scal_acc[0] = jnp.float32(0.0)   # BCE sum
            scal_acc[1] = jnp.float32(0.0)   # row-CE sum
            scal_acc[2] = jnp.float32(0.0)   # row-CE count
            col_gt_acc[...] = jnp.zeros_like(col_gt_acc)
            col_exp_acc[...] = jnp.zeros_like(col_exp_acc)
            p_row0_ref[...] = p[0:1, :]      # global row 0: target logit for every zero col

        scal_acc[0] += bce_part
        scal_acc[1] += row_ce_part
        scal_acc[2] += row_cnt_part
        col_gt_acc[...] += col_gt_part
        col_exp_acc[...] += col_exp_part

        @pl.when(step == last)
        def _finalize():
            loss = scal_acc[0] * inv_nm

            row_cnt = scal_acc[2]
            row_term = scal_acc[1] / jnp.maximum(row_cnt, 1.0)
            loss += jnp.where(row_cnt > 0.0, row_term, 0.0)

            col_mask = (col_gt_acc[...] == 0.0).astype(jnp.float32)      # (1, M)
            ce_col = jnp.log(col_exp_acc[...]) - p_row0_ref[...]         # (1, M)
            col_cnt = jnp.sum(col_mask)
            col_term = jnp.sum(col_mask * ce_col) / jnp.maximum(col_cnt, 1.0)
            loss += jnp.where(col_cnt > 0.0, col_term, 0.0)

            out_ref[0, 0] = loss

    return kernel


def affinity_loss(pred_aff_mat, gt_aff_mat, *, max_tile_n=256):
    """pred_aff_mat, gt_aff_mat: (N, M) arrays (any float dtype; upcast to f32 in-kernel).
    Returns a scalar float32 loss."""
    N, M = pred_aff_mat.shape
    assert gt_aff_mat.shape == (N, M)

    # Row tile: largest multiple of 8 dividing N that is <= max_tile_n; otherwise fall back
    # to a single full-array block (small or indivisible N keeps the block == full dims).
    tile_n = N
    if N > max_tile_n:
        for cand in range(max_tile_n - (max_tile_n % 8), 7, -8):
            if N % cand == 0:
                tile_n = cand
                break
    grid = (N // tile_n,)

    kernel = _make_affinity_loss_kernel(N, M, tile_n)

    bytes_accessed = N * M * (pred_aff_mat.dtype.itemsize + gt_aff_mat.dtype.itemsize) + 4
    cost = pl.CostEstimate(
        flops=12 * N * M,
        transcendentals=3 * N * M + 2 * N + 2 * M,
        bytes_accessed=bytes_accessed,
    )

    out = pl.pallas_call(
        kernel,
        out_shape=jax.ShapeDtypeStruct((1, 1), jnp.float32),
        grid=grid,
        in_specs=[
            pl.BlockSpec((tile_n, M), lambda i: (i, 0)),
            pl.BlockSpec((tile_n, M), lambda i: (i, 0)),
        ],
        out_specs=pl.BlockSpec(memory_space=pltpu.MemorySpace.SMEM),
        scratch_shapes=[
            pltpu.SMEM((3,), jnp.float32),          # [bce_sum, row_ce_sum, row_cnt]
            pltpu.VMEM((1, M), jnp.float32),        # gt column sums
            pltpu.VMEM((1, M), jnp.float32),        # exp(p) column sums
            pltpu.VMEM((1, M), jnp.float32),        # pred row 0
        ],
        compiler_params=pltpu.CompilerParams(
            # Grid axis carries the accumulators -> must stay "arbitrary".
            # TODO(synk): a v7x megacore split would need a cross-core combine (CMEM scratch).
            dimension_semantics=("arbitrary",)),
        cost_estimate=cost,
    )(pred_aff_mat, gt_aff_mat)
    return out[0, 0]


def reference_affinity_loss(pred, gt):
    """Pure NumPy mirror of the PyTorch forward (host-side, for verification)."""
    p = np.asarray(pred, dtype=np.float64)
    g = np.asarray(gt, dtype=np.float64)
    N, M = g.shape
    loss = (-(g * np.maximum(np.log(p), -100.0)
              + (1.0 - g) * np.maximum(np.log(1.0 - p), -100.0))).mean()
    rows = [i for i in range(N) if g[i, :].sum() == 0.0]
    if rows:
        logits = p[rows, :]
        tgt = g[rows, :].argmax(axis=1)
        lse = np.log(np.exp(logits).sum(axis=1))
        loss += (lse - logits[np.arange(len(rows)), tgt]).mean()
    cols = [j for j in range(M) if g[:, j].sum() == 0.0]
    if cols:
        logits = p[:, cols].T
        tgt = g[:, cols].argmax(axis=0)
        lse = np.log(np.exp(logits).sum(axis=1))
        loss += (lse - logits[np.arange(len(cols)), tgt]).mean()
    return np.float32(loss)


if __name__ == "__main__":
    key = jax.random.PRNGKey(0)
    k1, k2, k3, k4 = jax.random.split(key, 4)

    # Case 1: small MOT-style affinity matrix (single-block path, grid of 1).
    N, M = 16, 16
    pred_small = jax.nn.sigmoid(jax.random.normal(k1, (N, M), dtype=jnp.float32))
    gt_small = jax.random.bernoulli(k2, p=0.15, shape=(N, M)).astype(jnp.float32)

    loss_small = affinity_loss(pred_small, gt_small)
    jax.block_until_ready(loss_small)
    ref_small = reference_affinity_loss(pred_small, gt_small)
    assert np.allclose(np.asarray(loss_small), ref_small, rtol=1e-5, atol=1e-5), (
        float(loss_small), float(ref_small))

    # Case 2: larger matrix exercising the row-tiled, pipelined grid (2 tiles of 256 rows).
    N2, M2 = 512, 256
    pred_big = jax.nn.sigmoid(jax.random.normal(k3, (N2, M2), dtype=jnp.float32))
    gt_big = jax.random.bernoulli(k4, p=0.15, shape=(N2, M2)).astype(jnp.float32)
    # Force a few zero rows/cols so both CE terms are exercised across tiles.
    gt_big = gt_big.at[7, :].set(0.0).at[300, :].set(0.0)
    gt_big = gt_big.at[:, 5].set(0.0).at[:, 200].set(0.0)

    loss_big = affinity_loss(pred_big, gt_big)
    jax.block_until_ready(loss_big)
    ref_big = reference_affinity_loss(pred_big, gt_big)
    assert np.allclose(np.asarray(loss_big), ref_big, rtol=1e-4, atol=1e-4), (
        float(loss_big), float(ref_big))

    print("KERNEL_OK")
</pallas_src>

<mosaic_0001>
module attributes {stable_mosaic.version = 11 : i64} {
  func.func @kernel(%arg0: i32, %arg1: memref<16x16xf32, #tpu.memory_space<vmem>>, %arg2: memref<16x16xf32, #tpu.memory_space<vmem>>, %arg3: memref<1x1xf32, #tpu.memory_space<smem>>, %arg4: memref<3xf32, #tpu.memory_space<smem>>, %arg5: memref<1x16xf32, #tpu.memory_space<vmem>>, %arg6: memref<1x16xf32, #tpu.memory_space<vmem>>, %arg7: memref<1x16xf32, #tpu.memory_space<vmem>>) attributes {dimension_semantics = [#tpu.dimension_semantics<arbitrary>], iteration_bounds = array<i64: 1>, scalar_prefetch = 0 : i64, scratch_operands = 4 : i64, tpu.core_type = #tpu.core_type<tc>, window_params = [{transform_indices = @transform_0, window_bounds = array<i64: 16, 16>}, {transform_indices = @transform_1, window_bounds = array<i64: 16, 16>}, {transform_indices = @transform_2, window_bounds = array<i64: 1, 1>}]} {
    %c0 = arith.constant 0 : index
    %c0_0 = arith.constant 0 : index
    %0 = vector.load %arg1[%c0, %c0_0] : memref<16x16xf32, #tpu.memory_space<vmem>>, vector<16x16xf32>
    %c0_1 = arith.constant 0 : index
    %c0_2 = arith.constant 0 : index
    %1 = vector.load %arg2[%c0_1, %c0_2] : memref<16x16xf32, #tpu.memory_space<vmem>>, vector<16x16xf32>
    %cst = arith.constant 1.000000e+00 : f32
    %2 = vector.broadcast %cst : f32 to vector<16x1xf32>
    %cst_3 = arith.constant 1.000000e+00 : f32
    %3 = vector.broadcast %cst_3 : f32 to vector<1x16xf32>
    %4 = math.log %0 : vector<16x16xf32>
    %cst_4 = arith.constant -1.000000e+02 : f32
    %5 = vector.broadcast %cst_4 : f32 to vector<16x16xf32>
    %6 = arith.maximumf %4, %5 : vector<16x16xf32>
    %cst_5 = arith.constant 1.000000e+00 : f32
    %7 = vector.broadcast %cst_5 : f32 to vector<16x16xf32>
    %8 = arith.subf %7, %0 : vector<16x16xf32>
    %9 = math.log %8 : vector<16x16xf32>
    %cst_6 = arith.constant -1.000000e+02 : f32
    %10 = vector.broadcast %cst_6 : f32 to vector<16x16xf32>
    %11 = arith.maximumf %9, %10 : vector<16x16xf32>
    %12 = arith.subf %6, %11 : vector<16x16xf32>
    %13 = arith.mulf %1, %12 : vector<16x16xf32>
    %14 = arith.addf %11, %13 : vector<16x16xf32>
    %cst_7 = arith.constant 0.000000e+00 : f32
    %15 = vector.broadcast %cst_7 : f32 to vector<16x16xf32>
    %16 = arith.subf %15, %14 : vector<16x16xf32>
    %cst_8 = arith.constant dense<0.000000e+00> : vector<16x1xf32>
    %17 = tpu.matmul %16, %2, %cst_8 {dimension_numbers = #tpu.dot_dimension_numbers<[1], [0], [0], [1], [0, 0, 1, 1], [], []>} : vector<16x16xf32>, vector<16x1xf32>, vector<16x1xf32> -> vector<16x1xf32>
    %18 = vector.shape_cast %17 : vector<16x1xf32> to vector<1x16x1xf32>
    %cst_9 = arith.constant dense<0.000000e+00> : vector<1xf32>
    %19 = vector.multi_reduction <add>, %18, %cst_9 [1, 2] : vector<1x16x1xf32> to vector<1xf32>
    %20 = vector.shape_cast %19 : vector<1xf32> to vector<1x1x1xf32>
    %21 = vector.extract %20[0, 0, 0] : f32 from vector<1x1x1xf32>
    %22 = math.exp %0 : vector<16x16xf32>
    %cst_10 = arith.constant dense<0.000000e+00> : vector<16x1xf32>
    %23 = tpu.matmul %1, %2, %cst_10 {dimension_numbers = #tpu.dot_dimension_numbers<[1], [0], [0], [1], [0, 0, 1, 1], [], []>} : vector<16x16xf32>, vector<16x1xf32>, vector<16x1xf32> -> vector<16x1xf32>
    %cst_11 = arith.constant 0.000000e+00 : f32
    %24 = vector.broadcast %cst_11 : f32 to vector<16x1xf32>
    %25 = arith.cmpf oeq, %23, %24 : vector<16x1xf32>
    %26 = arith.extui %25 : vector<16x1xi1> to vector<16x1xi32>
    %27 = arith.sitofp %26 : vector<16x1xi32> to vector<16x1xf32>
    %cst_12 = arith.constant dense<0.000000e+00> : vector<16x1xf32>
    %28 = tpu.matmul %22, %2, %cst_12 {dimension_numbers = #tpu.dot_dimension_numbers<[1], [0], [0], [1], [0, 0, 1, 1], [], []>} : vector<16x16xf32>, vector<16x1xf32>, vector<16x1xf32> -> vector<16x1xf32>
    %29 = math.log %28 : vector<16x1xf32>
    %30 = vector.extract_strided_slice %0 {offsets = [0, 0], sizes = [16, 1], strides = [1, 1]} : vector<16x16xf32> to vector<16x1xf32>
    %31 = arith.subf %29, %30 : vector<16x1xf32>
    %32 = arith.mulf %27, %31 : vector<16x1xf32>
    %33 = vector.shape_cast %32 : vector<16x1xf32> to vector<1x16x1xf32>
    %cst_13 = arith.constant dense<0.000000e+00> : vector<1xf32>
    %34 = vector.multi_reduction <add>, %33, %cst_13 [1, 2] : vector<1x16x1xf32> to vector<1xf32>
    %35 = vector.shape_cast %34 : vector<1xf32> to vector<1x1x1xf32>
    %36 = vector.extract %35[0, 0, 0] : f32 from vector<1x1x1xf32>
    %37 = vector.shape_cast %27 : vector<16x1xf32> to vector<1x16x1xf32>
    %cst_14 = arith.constant dense<0.000000e+00> : vector<1xf32>
    %38 = vector.multi_reduction <add>, %37, %cst_14 [1, 2] : vector<1x16x1xf32> to vector<1xf32>
    %39 = vector.shape_cast %38 : vector<1xf32> to vector<1x1x1xf32>
    %40 = vector.extract %39[0, 0, 0] : f32 from vector<1x1x1xf32>
    %cst_15 = arith.constant dense<0.000000e+00> : vector<1x16xf32>
    %41 = tpu.matmul %3, %1, %cst_15 {dimension_numbers = #tpu.dot_dimension_numbers<[1], [0], [0], [1], [0, 0, 1, 1], [], []>} : vector<1x16xf32>, vector<16x16xf32>, vector<1x16xf32> -> vector<1x16xf32>
    %cst_16 = arith.constant dense<0.000000e+00> : vector<1x16xf32>
    %42 = tpu.matmul %3, %22, %cst_16 {dimension_numbers = #tpu.dot_dimension_numbers<[1], [0], [0], [1], [0, 0, 1, 1], [], []>} : vector<1x16xf32>, vector<16x16xf32>, vector<1x16xf32> -> vector<1x16xf32>
    %c0_i32 = arith.constant 0 : i32
    %43 = arith.cmpi eq, %arg0, %c0_i32 : i32
    %44 = arith.extui %43 : i1 to i32
    %c0_i32_17 = arith.constant 0 : i32
    %45 = arith.cmpi ne, %44, %c0_i32_17 : i32
    scf.if %45 {
      %cst_32 = arith.constant 0.000000e+00 : f32
      %c0_33 = arith.constant 0 : index
      %64 = memref.load %arg4[%c0_33] : memref<3xf32, #tpu.memory_space<smem>>
      memref.store %cst_32, %arg4[%c0_33] : memref<3xf32, #tpu.memory_space<smem>>
      %cst_34 = arith.constant 0.000000e+00 : f32
      %c1_35 = arith.constant 1 : index
      %65 = memref.load %arg4[%c1_35] : memref<3xf32, #tpu.memory_space<smem>>
      memref.store %cst_34, %arg4[%c1_35] : memref<3xf32, #tpu.memory_space<smem>>
      %cst_36 = arith.constant 0.000000e+00 : f32
      %c2_37 = arith.constant 2 : index
      %66 = memref.load %arg4[%c2_37] : memref<3xf32, #tpu.memory_space<smem>>
      memref.store %cst_36, %arg4[%c2_37] : memref<3xf32, #tpu.memory_space<smem>>
      %cst_38 = arith.constant 0.000000e+00 : f32
      %67 = vector.broadcast %cst_38 : f32 to vector<1x16xf32>
      %c0_39 = arith.constant 0 : index
      %c0_40 = arith.constant 0 : index
      %68 = vector.load %arg5[%c0_39, %c0_40] : memref<1x16xf32, #tpu.memory_space<vmem>>, vector<1x16xf32>
      tpu.vector_store %arg5[%c0_39, %c0_40], %67 {strides = array<i32>} : memref<1x16xf32, #tpu.memory_space<vmem>>, vector<1x16xf32>,
      %cst_41 = arith.constant 0.000000e+00 : f32
      %69 = vector.broadcast %cst_41 : f32 to vector<1x16xf32>
      %c0_42 = arith.constant 0 : index
      %c0_43 = arith.constant 0 : index
      %70 = vector.load %arg6[%c0_42, %c0_43] : memref<1x16xf32, #tpu.memory_space<vmem>>, vector<1x16xf32>
      tpu.vector_store %arg6[%c0_42, %c0_43], %69 {strides = array<i32>} : memref<1x16xf32, #tpu.memory_space<vmem>>, vector<1x16xf32>,
      %71 = vector.extract_strided_slice %0 {offsets = [0, 0], sizes = [1, 16], strides = [1, 1]} : vector<16x16xf32> to vector<1x16xf32>
      %c0_44 = arith.constant 0 : index
      %c0_45 = arith.constant 0 : index
      %72 = vector.load %arg7[%c0_44, %c0_45] : memref<1x16xf32, #tpu.memory_space<vmem>>, vector<1x16xf32>
      tpu.vector_store %arg7[%c0_44, %c0_45], %71 {strides = array<i32>} : memref<1x16xf32, #tpu.memory_space<vmem>>, vector<1x16xf32>,
    } else {
    }
    %c0_18 = arith.constant 0 : index
    %46 = memref.load %arg4[%c0_18] : memref<3xf32, #tpu.memory_space<smem>>
    %47 = arith.addf %46, %21 : f32
    %c0_19 = arith.constant 0 : index
    %48 = memref.load %arg4[%c0_19] : memref<3xf32, #tpu.memory_space<smem>>
    memref.store %47, %arg4[%c0_19] : memref<3xf32, #tpu.memory_space<smem>>
    %c1 = arith.constant 1 : index
    %49 = memref.load %arg4[%c1] : memref<3xf32, #tpu.memory_space<smem>>
    %50 = arith.addf %49, %36 : f32
    %c1_20 = arith.constant 1 : index
    %51 = memref.load %arg4[%c1_20] : memref<3xf32, #tpu.memory_space<smem>>
    memref.store %50, %arg4[%c1_20] : memref<3xf32, #tpu.memory_space<smem>>
    %c2 = arith.constant 2 : index
    %52 = memref.load %arg4[%c2] : memref<3xf32, #tpu.memory_space<smem>>
    %53 = arith.addf %52, %40 : f32
    %c2_21 = arith.constant 2 : index
    %54 = memref.load %arg4[%c2_21] : memref<3xf32, #tpu.memory_space<smem>>
    memref.store %53, %arg4[%c2_21] : memref<3xf32, #tpu.memory_space<smem>>
    %c0_22 = arith.constant 0 : index
    %c0_23 = arith.constant 0 : index
    %55 = vector.load %arg5[%c0_22, %c0_23] : memref<1x16xf32, #tpu.memory_space<vmem>>, vector<1x16xf32>
    %56 = arith.addf %55, %41 : vector<1x16xf32>
    %c0_24 = arith.constant 0 : index
    %c0_25 = arith.constant 0 : index
    %57 = vector.load %arg5[%c0_24, %c0_25] : memref<1x16xf32, #tpu.memory_space<vmem>>, vector<1x16xf32>
    tpu.vector_store %arg5[%c0_24, %c0_25], %56 {strides = array<i32>} : memref<1x16xf32, #tpu.memory_space<vmem>>, vector<1x16xf32>,
    %c0_26 = arith.constant 0 : index
    %c0_27 = arith.constant 0 : index
    %58 = vector.load %arg6[%c0_26, %c0_27] : memref<1x16xf32, #tpu.memory_space<vmem>>, vector<1x16xf32>
    %59 = arith.addf %58, %42 : vector<1x16xf32>
    %c0_28 = arith.constant 0 : index
    %c0_29 = arith.constant 0 : index
    %60 = vector.load %arg6[%c0_28, %c0_29] : memref<1x16xf32, #tpu.memory_space<vmem>>, vector<1x16xf32>
    tpu.vector_store %arg6[%c0_28, %c0_29], %59 {strides = array<i32>} : memref<1x16xf32, #tpu.memory_space<vmem>>, vector<1x16xf32>,
    %c0_i32_30 = arith.constant 0 : i32
    %61 = arith.cmpi eq, %arg0, %c0_i32_30 : i32
    %62 = arith.extui %61 : i1 to i32
    %c0_i32_31 = arith.constant 0 : i32
    %63 = arith.cmpi ne, %62, %c0_i32_31 : i32
    scf.if %63 {
      %c0_32 = arith.constant 0 : index
      %64 = memref.load %arg4[%c0_32] : memref<3xf32, #tpu.memory_space<smem>>
      %cst_33 = arith.constant 3.906250e-03 : f32
      %65 = arith.mulf %64, %cst_33 : f32
      %c2_34 = arith.constant 2 : index
      %66 = memref.load %arg4[%c2_34] : memref<3xf32, #tpu.memory_space<smem>>
      %c1_35 = arith.constant 1 : index
      %67 = memref.load %arg4[%c1_35] : memref<3xf32, #tpu.memory_space<smem>>
      %cst_36 = arith.constant 1.000000e+00 : f32
      %68 = arith.maximumf %66, %cst_36 : f32
      %69 = arith.divf %67, %68 : f32
      %cst_37 = arith.constant 0.000000e+00 : f32
      %70 = arith.cmpf ogt, %66, %cst_37 : f32
      %cst_38 = arith.constant 0.000000e+00 : f32
      %71 = arith.select %70, %69, %cst_38 : f32
      %72 = arith.addf %65, %71 : f32
      %c0_39 = arith.constant 0 : index
      %c0_40 = arith.constant 0 : index
      %73 = vector.load %arg5[%c0_39, %c0_40] : memref<1x16xf32, #tpu.memory_space<vmem>>, vector<1x16xf32>
      %cst_41 = arith.constant 0.000000e+00 : f32
      %74 = vector.broadcast %cst_41 : f32 to vector<1x16xf32>
      %75 = arith.cmpf oeq, %73, %74 : vector<1x16xf32>
      %76 = arith.extui %75 : vector<1x16xi1> to vector<1x16xi32>
      %77 = arith.sitofp %76 : vector<1x16xi32> to vector<1x16xf32>
      %c0_42 = arith.constant 0 : index
      %c0_43 = arith.constant 0 : index
      %78 = vector.load %arg6[%c0_42, %c0_43] : memref<1x16xf32, #tpu.memory_space<vmem>>, vector<1x16xf32>
      %79 = math.log %78 : vector<1x16xf32>
      %c0_44 = arith.constant 0 : index
      %c0_45 = arith.constant 0 : index
      %80 = vector.load %arg7[%c0_44, %c0_45] : memref<1x16xf32, #tpu.memory_space<vmem>>, vector<1x16xf32>
      %81 = arith.subf %79, %80 : vector<1x16xf32>
      %82 = vector.shape_cast %77 : vector<1x16xf32> to vector<1x1x16xf32>
      %cst_46 = arith.constant dense<0.000000e+00> : vector<1xf32>
      %83 = vector.multi_reduction <add>, %82, %cst_46 [1, 2] : vector<1x1x16xf32> to vector<1xf32>
      %84 = vector.shape_cast %83 : vector<1xf32> to vector<1x1x1xf32>
      %85 = vector.extract %84[0, 0, 0] : f32 from vector<1x1x1xf32>
      %86 = arith.mulf %77, %81 : vector<1x16xf32>
      %87 = vector.shape_cast %86 : vector<1x16xf32> to vector<1x1x16xf32>
      %cst_47 = arith.constant dense<0.000000e+00> : vector<1xf32>
      %88 = vector.multi_reduction <add>, %87, %cst_47 [1, 2] : vector<1x1x16xf32> to vector<1xf32>
      %89 = vector.shape_cast %88 : vector<1xf32> to vector<1x1x1xf32>
      %90 = vector.extract %89[0, 0, 0] : f32 from vector<1x1x1xf32>
      %cst_48 = arith.constant 1.000000e+00 : f32
      %91 = arith.maximumf %85, %cst_48 : f32
      %92 = arith.divf %90, %91 : f32
      %cst_49 = arith.constant 0.000000e+00 : f32
      %93 = arith.cmpf ogt, %85, %cst_49 : f32
      %cst_50 = arith.constant 0.000000e+00 : f32
      %94 = arith.select %93, %92, %cst_50 : f32
      %95 = arith.addf %72, %94 : f32
      %c0_51 = arith.constant 0 : index
      %c0_52 = arith.constant 0 : index
      %96 = memref.load %arg3[%c0_51, %c0_52] : memref<1x1xf32, #tpu.memory_space<smem>>
      memref.store %95, %arg3[%c0_51, %c0_52] : memref<1x1xf32, #tpu.memory_space<smem>>
    } else {
    }
    return
  }
  func.func @transform_0(%arg0: i32) -> (i32, i32) {
    %c0_i32 = arith.constant 0 : i32
    %c0_i32_0 = arith.constant 0 : i32
    return %arg0, %c0_i32 : i32, i32
  }
  func.func @transform_1(%arg0: i32) -> (i32, i32) {
    %c0_i32 = arith.constant 0 : i32
    %c0_i32_0 = arith.constant 0 : i32
    return %arg0, %c0_i32 : i32, i32
  }
  func.func @transform_2(%arg0: i32) -> (i32, i32) {
    %c0_i32 = arith.constant 0 : i32
    %c0_i32_0 = arith.constant 0 : i32
    %c0_i32_1 = arith.constant 0 : i32
    return %c0_i32, %c0_i32_0 : i32, i32
  }
}

</mosaic_0001>

<llo_original>
// kernel: tpu_custom_call.1
$region0: #{tpu_custom_call.1}
  #allocation0 [shape = 'u32[]', space=smem, size = 0x4, offset = 0x4, fixed_abs, tag = 'smem constant byte address 0x4 - core index']
  #allocation1 [shape = 'u32[144,128]{1,0:T(1,128)}', space=vmem, size = 0x12000, scoped, tag = 'internal scratch']
  #allocation2 [shape = 'f32[3]{0:T(128)}', space=smem, size = 0x200, scoped, tag = 'scratch operand']
  #allocation3 [shape = 'f32[1,16]{1,0:T(1,128)}', space=vmem, size = 0x200, scoped, tag = 'scratch operand']
  #allocation4 [shape = 'f32[1,16]{1,0:T(1,128)}', space=vmem, size = 0x200, scoped, tag = 'scratch operand']
  #allocation5 [shape = 'f32[1,16]{1,0:T(1,128)}', space=vmem, size = 0x200, scoped, tag = 'scratch operand']
  %s0 = inlined_call_operand.hbm [shape: f32[16,16], index: 0, kind: input, shape index: {}]
  %s1 = inlined_call_operand.hbm [shape: f32[16,16], index: 1, kind: input, shape index: {}]
  %s2 = inlined_call_operand.hbm [shape: f32[1,1], index: 2, kind: output, shape index: {}]
  %s3 = sld [smem:[#allocation0]]
  $region34: #{tpu_custom_call.1} parent=0
    _
  %s5 = ssub.s32 1, %s3
  %s6 = scalar_select 0, %s5, %s3
  $region1: #{tpu_custom_call.1} parent=0
    #allocation6 [shape = 'u8[8192]{0}', space=vmem, size = 0x2000, scoped, tag = 'input window, operand 0, single buffered']
    #allocation7 [shape = 's32[1]{0}', space=sflag, size = 0x4, scoped, tag = 'scoped memory for tpu_custom_call.1']
    #allocation8 [shape = 's32[1]{0}', space=sflag, size = 0x4, scoped, tag = 'scoped memory for tpu_custom_call.1']
    #allocation9 [shape = 'u8[8192]{0}', space=vmem, size = 0x2000, scoped, tag = 'input window, operand 1, single buffered']
    #allocation10 [shape = 's32[1]{0}', space=sflag, size = 0x4, scoped, tag = 'scoped memory for tpu_custom_call.1']
    #allocation11 [shape = 'u8[512]{0}', space=smem, size = 0x200, scoped, tag = 'output window, operand 0, single buffered']
    %7 = vsyncpa [#allocation7], 0
    %8 = vsyncpa [#allocation10], 0
    %9 = vsyncpa [#allocation8], 0
    // Predicated region
    $region2: #{tpu_custom_call.1} parent=1 // pred_check
      _
    $region3: #{tpu_custom_call.1} parent=1 // pred_check_branch
      %11 = sbr.rel (0) target = $region5
    $region4: #{tpu_custom_call.1} parent=1 // pred_region
      %s13 = ssub.s32 256, 256
      %14 = vsyncadd [#allocation7], %s13
      %s15 = sshll.u32 [#allocation6], 4
      %s16 = int_to_ptr.vmem [resolvable:$true] %s15
      %21 = dma.hbm_to_vmem [thread:$0]  %s0, 256, %s16, [#allocation7], 128, 128, 8
    $region5: #{tpu_custom_call.1} parent=1 // pred_fallthru
      _
    // Predicated region
    $region6: #{tpu_custom_call.1} parent=1 // pred_check
      _
    $region7: #{tpu_custom_call.1} parent=1 // pred_check_branch
      %23 = sbr.rel (0) target = $region9
    $region8: #{tpu_custom_call.1} parent=1 // pred_region
      %s25 = ssub.s32 256, 256
      %26 = vsyncadd [#allocation10], %s25
      %s27 = sshll.u32 [#allocation9], 4
      %s28 = int_to_ptr.vmem [resolvable:$true] %s27
      %33 = dma.hbm_to_vmem [thread:$0]  %s1, 256, %s28, [#allocation10], 128, 128, 8
    $region9: #{tpu_custom_call.1} parent=1 // pred_fallthru
      _
    // Predicated region
    $region10: #{tpu_custom_call.1} parent=1 // pred_check
      _
    $region11: #{tpu_custom_call.1} parent=1 // pred_check_branch
      %35 = sbr.rel (0) target = $region13
    $region12: #{tpu_custom_call.1} parent=1 // pred_region
      %36 = dma.done [#allocation7], 256
    $region13: #{tpu_custom_call.1} parent=1 // pred_fallthru
      _
    // Predicated region
    $region14: #{tpu_custom_call.1} parent=1 // pred_check
      _
    $region15: #{tpu_custom_call.1} parent=1 // pred_check_branch
      %38 = sbr.rel (0) target = $region17
    $region16: #{tpu_custom_call.1} parent=1 // pred_region
      %39 = dma.done [#allocation10], 256
    $region17: #{tpu_custom_call.1} parent=1 // pred_fallthru
      _
    %v40 = vld [vmem:[#allocation6] sm:$0xff]
    %v41 = vld [vmem:[#allocation6 + $0x8] sm:$0xff]
    %v42 = vld [vmem:[#allocation9] sm:$0xff]
    %v43 = vld [vmem:[#allocation9 + $0x8] sm:$0xff]
    %v44 = vlog2.pop %v40
    %v45 = vmul.f32 %v44, 0.6931472
    %v46 = vlog2.pop %v41
    %v47 = vmul.f32 %v46, 0.6931472
    %v48 = vmax.f32 %v45, -100.0
    %v49 = vmax.f32 %v47, -100.0
    %v50 = vsub.f32 1.0, %v40
    %v51 = vsub.f32 1.0, %v41
    %v52 = vlog2.pop %v50
    %v53 = vmul.f32 %v52, 0.6931472
    %v54 = vlog2.pop %v51
    %v55 = vmul.f32 %v54, 0.6931472
    %v56 = vmax.f32 %v53, -100.0
    %v57 = vmax.f32 %v55, -100.0
    %v58 = vsub.f32 %v48, %v56
    %v59 = vsub.f32 %v49, %v57
    %v60 = vmul.f32 %v42, %v58
    %v61 = vmul.f32 %v43, %v59
    %v62 = vadd.f32 %v56, %v60
    %v63 = vadd.f32 %v57, %v61
    %v64 = vsub.f32 0.0, %v62
    %v65 = vsub.f32 0.0, %v63
    %vm66 = vcmask 130048
    %v68 = vsel %vm66, %v64, 0
    %v71 = vsel %vm66, %v65, 0
    %73 = vmatprep.subr.mxu0 0.0
    %74 = vmatpush1.msra.mxu0 1.0
    %75 = vmatprep.subr.mxu0 0.0
    %76 = vmatpush1.msra.mxu0 1.0
    %77 = vmatprep.subr.mxu0 0.0
    %78 = vmatpush1.msra.mxu0 0.0
    %79 = vmatprep.subr.mxu0 0.0
    %80 = vmatpush1.msra.mxu0 0.0
    %81 = vmatprep.subr.mxu0 0.0
    %82 = vmatpush1.msra.mxu0 0.0
    %83 = vmatprep.subr.mxu0 0.0
    %84 = vmatpush1.msra.mxu0 0.0
    %85 = vmatprep.subr.mxu0 0.0
    %86 = vmatpush1.msra.mxu0 0.0
    %87 = vmatprep.subr.mxu0 0.0
    %88 = vmatpush1.msra.mxu0 0.0
    %89 = vmatprep.subr.mxu0 0.0
    %90 = vmatpush1.msra.mxu0 0.0
    %91 = vmatprep.subr.mxu0 0.0
    %92 = vmatpush1.msra.mxu0 0.0
    %93 = vmatprep.subr.mxu0 0.0
    %94 = vmatpush1.msra.mxu0 0.0
    %95 = vmatprep.subr.mxu0 0.0
    %96 = vmatpush1.msra.mxu0 0.0
    %97 = vmatprep.subr.mxu0 0.0
    %98 = vmatpush1.msra.mxu0 0.0
    %99 = vmatprep.subr.mxu0 0.0
    %100 = vmatpush1.msra.mxu0 0.0
    %101 = vmatprep.subr.mxu0 0.0
    %102 = vmatpush1.msra.mxu0 0.0
    %103 = vmatprep.subr.mxu0 0.0
    %104 = vmatpush1.msra.mxu0 0.0
    %105 = vmatprep.subr.mxu0 0.0
    %106 = vmatpush1.msra.mxu0 0.0
    %107 = vmatprep.subr.mxu0 0.0
    %108 = vmatpush1.msra.mxu0 0.0
    %109 = vmatprep.subr.mxu0 0.0
    %110 = vmatpush1.msra.mxu0 0.0
    %111 = vmatprep.subr.mxu0 0.0
    %112 = vmatpush1.msra.mxu0 0.0
    %113 = vmatprep.subr.mxu0 0.0
    %114 = vmatpush1.msra.mxu0 0.0
    %115 = vmatprep.subr.mxu0 0.0
    %116 = vmatpush1.msra.mxu0 0.0
    %117 = vmatprep.subr.mxu0 0.0
    %118 = vmatpush1.msra.mxu0 0.0
    %119 = vmatprep.subr.mxu0 0.0
    %120 = vmatpush1.msra.mxu0 0.0
    %121 = vmatprep.subr.mxu0 0.0
    %122 = vmatpush1.msra.mxu0 0.0
    %123 = vmatprep.subr.mxu0 0.0
    %124 = vmatpush1.msra.mxu0 0.0
    %125 = vmatprep.subr.mxu0 0.0
    %126 = vmatpush1.msra.mxu0 0.0
    %127 = vmatprep.subr.mxu0 0.0
    %128 = vmatpush1.msra.mxu0 0.0
    %129 = vmatprep.subr.mxu0 0.0
    %130 = vmatpush1.msra.mxu0 0.0
    %131 = vmatprep.subr.mxu0 0.0
    %132 = vmatpush1.msra.mxu0 0.0
    %133 = vmatprep.subr.mxu0 0.0
    %134 = vmatpush1.msra.mxu0 0.0
    %135 = vmatprep.subr.mxu0 0.0
    %136 = vmatpush1.msra.mxu0 0.0
    %137 = vmatprep.mubr.f32.mxu0 0.0
    %138 = vmatmul.mubr.f32.gmra.mrb[0].mxu0 %v68
    %v139 = vpop.f32.mrb[0].mxu0
    %v140 = vadd.f32 0.0, %v139
    %v141 = vpop.f32.mrb[0].mxu0
    %142 = vmatprep.mubr.f32.mxu0 0.0
    %143 = vmatmul.mubr.f32.gmra.mrb[0].mxu0 %v71
    %v144 = vpop.f32.mrb[0].mxu0
    %v145 = vadd.f32 0.0, %v144
    %v146 = vpop.f32.mrb[0].mxu0
    %147 = vdwg.mxu0
    %vm148 = vcmask 7168
    %v149 = vsel %vm148, %v140, 0.0
    %v150 = vsel %vm148, %v145, 0.0
    %v151 = vadd.f32 %v149, %v150
    %152 = vadd.xlane.f32.xlu0 %v151
    %v153 = vpop.xlane.xlu0 %152
    %v154 = vrot.slane %v153, 4
    %v155 = vadd.f32 %v153, %v154
    %v156 = vrot.slane %v155, 2
    %v157 = vadd.f32 %v155, %v156
    %v158 = vrot.slane %v157, 1
    %v159 = vadd.f32 %v157, %v158
    %s160 = vtos %v159
    %v161 = vmul.f32 %v40, 1.442695
    %v162 = vpow.pop %v161
    %v163 = vmul.f32 %v41, 1.442695
    %v164 = vpow.pop %v163
    %v166 = vsel %vm66, %v42, 0
    %v169 = vsel %vm66, %v43, 0
    %171 = vmatprep.subr.mxu0 0.0
    %172 = vmatpush1.msra.mxu0 1.0
    %173 = vmatprep.subr.mxu0 0.0
    %174 = vmatpush1.msra.mxu0 1.0
    %175 = vmatprep.subr.mxu0 0.0
    %176 = vmatpush1.msra.mxu0 0.0
    %177 = vmatprep.subr.mxu0 0.0
    %178 = vmatpush1.msra.mxu0 0.0
    %179 = vmatprep.subr.mxu0 0.0
    %180 = vmatpush1.msra.mxu0 0.0
    %181 = vmatprep.subr.mxu0 0.0
    %182 = vmatpush1.msra.mxu0 0.0
    %183 = vmatprep.subr.mxu0 0.0
    %184 = vmatpush1.msra.mxu0 0.0
    %185 = vmatprep.subr.mxu0 0.0
    %186 = vmatpush1.msra.mxu0 0.0
    %187 = vmatprep.subr.mxu0 0.0
    %188 = vmatpush1.msra.mxu0 0.0
    %189 = vmatprep.subr.mxu0 0.0
    %190 = vmatpush1.msra.mxu0 0.0
    %191 = vmatprep.subr.mxu0 0.0
    %192 = vmatpush1.msra.mxu0 0.0
    %193 = vmatprep.subr.mxu0 0.0
    %194 = vmatpush1.msra.mxu0 0.0
    %195 = vmatprep.subr.mxu0 0.0
    %196 = vmatpush1.msra.mxu0 0.0
    %197 = vmatprep.subr.mxu0 0.0
    %198 = vmatpush1.msra.mxu0 0.0
    %199 = vmatprep.subr.mxu0 0.0
    %200 = vmatpush1.msra.mxu0 0.0
    %201 = vmatprep.subr.mxu0 0.0
    %202 = vmatpush1.msra.mxu0 0.0
    %203 = vmatprep.subr.mxu0 0.0
    %204 = vmatpush1.msra.mxu0 0.0
    %205 = vmatprep.subr.mxu0 0.0
    %206 = vmatpush1.msra.mxu0 0.0
    %207 = vmatprep.subr.mxu0 0.0
    %208 = vmatpush1.msra.mxu0 0.0
    %209 = vmatprep.subr.mxu0 0.0
    %210 = vmatpush1.msra.mxu0 0.0
    %211 = vmatprep.subr.mxu0 0.0
    %212 = vmatpush1.msra.mxu0 0.0
    %213 = vmatprep.subr.mxu0 0.0
    %214 = vmatpush1.msra.mxu0 0.0
    %215 = vmatprep.subr.mxu0 0.0
    %216 = vmatpush1.msra.mxu0 0.0
    %217 = vmatprep.subr.mxu0 0.0
    %218 = vmatpush1.msra.mxu0 0.0
    %219 = vmatprep.subr.mxu0 0.0
    %220 = vmatpush1.msra.mxu0 0.0
    %221 = vmatprep.subr.mxu0 0.0
    %222 = vmatpush1.msra.mxu0 0.0
    %223 = vmatprep.subr.mxu0 0.0
    %224 = vmatpush1.msra.mxu0 0.0
    %225 = vmatprep.subr.mxu0 0.0
    %226 = vmatpush1.msra.mxu0 0.0
    %227 = vmatprep.subr.mxu0 0.0
    %228 = vmatpush1.msra.mxu0 0.0
    %229 = vmatprep.subr.mxu0 0.0
    %230 = vmatpush1.msra.mxu0 0.0
    %231 = vmatprep.subr.mxu0 0.0
    %232 = vmatpush1.msra.mxu0 0.0
    %233 = vmatprep.subr.mxu0 0.0
    %234 = vmatpush1.msra.mxu0 0.0
    %235 = vmatprep.mubr.f32.mxu0 0.0
    %236 = vmatmul.mubr.f32.gmra.mrb[0].mxu0 %v166
    %v237 = vpop.f32.mrb[0].mxu0
    %v238 = vadd.f32 0.0, %v237
    %v239 = vpop.f32.mrb[0].mxu0
    %240 = vmatprep.mubr.f32.mxu0 0.0
    %241 = vmatmul.mubr.f32.gmra.mrb[0].mxu0 %v169
    %v242 = vpop.f32.mrb[0].mxu0
    %v243 = vadd.f32 0.0, %v242
    %v244 = vpop.f32.mrb[0].mxu0
    %245 = vdwg.mxu0
    %vm246 = vcmp.eq.f32.partialorder %v238, 0.0
    %vm247 = vcmp.eq.f32.partialorder %v243, 0.0
    %v248 = vsel %vm246, 1, 0
    %v249 = vsel %vm247, 1, 0
    %v250 = vcvt.s32.f32 %v248
    %v251 = vcvt.s32.f32 %v249
    %v253 = vsel %vm66, %v162, 0
    %v256 = vsel %vm66, %v164, 0
    %258 = vmatprep.subr.mxu0 0.0
    %259 = vmatpush1.msra.mxu0 1.0
    %260 = vmatprep.subr.mxu0 0.0
    %261 = vmatpush1.msra.mxu0 1.0
    %262 = vmatprep.subr.mxu0 0.0
    %263 = vmatpush1.msra.mxu0 0.0
    %264 = vmatprep.subr.mxu0 0.0
    %265 = vmatpush1.msra.mxu0 0.0
    %266 = vmatprep.subr.mxu0 0.0
    %267 = vmatpush1.msra.mxu0 0.0
    %268 = vmatprep.subr.mxu0 0.0
    %269 = vmatpush1.msra.mxu0 0.0
    %270 = vmatprep.subr.mxu0 0.0
    %271 = vmatpush1.msra.mxu0 0.0
    %272 = vmatprep.subr.mxu0 0.0
    %273 = vmatpush1.msra.mxu0 0.0
    %274 = vmatprep.subr.mxu0 0.0
    %275 = vmatpush1.msra.mxu0 0.0
    %276 = vmatprep.subr.mxu0 0.0
    %277 = vmatpush1.msra.mxu0 0.0
    %278 = vmatprep.subr.mxu0 0.0
    %279 = vmatpush1.msra.mxu0 0.0
    %280 = vmatprep.subr.mxu0 0.0
    %281 = vmatpush1.msra.mxu0 0.0
    %282 = vmatprep.subr.mxu0 0.0
    %283 = vmatpush1.msra.mxu0 0.0
    %284 = vmatprep.subr.mxu0 0.0
    %285 = vmatpush1.msra.mxu0 0.0
    %286 = vmatprep.subr.mxu0 0.0
    %287 = vmatpush1.msra.mxu0 0.0
    %288 = vmatprep.subr.mxu0 0.0
    %289 = vmatpush1.msra.mxu0 0.0
    %290 = vmatprep.subr.mxu0 0.0
    %291 = vmatpush1.msra.mxu0 0.0
    %292 = vmatprep.subr.mxu0 0.0
    %293 = vmatpush1.msra.mxu0 0.0
    %294 = vmatprep.subr.mxu0 0.0
    %295 = vmatpush1.msra.mxu0 0.0
    %296 = vmatprep.subr.mxu0 0.0
    %297 = vmatpush1.msra.mxu0 0.0
    %298 = vmatprep.subr.mxu0 0.0
    %299 = vmatpush1.msra.mxu0 0.0
    %300 = vmatprep.subr.mxu0 0.0
    %301 = vmatpush1.msra.mxu0 0.0
    %302 = vmatprep.subr.mxu0 0.0
    %303 = vmatpush1.msra.mxu0 0.0
    %304 = vmatprep.subr.mxu0 0.0
    %305 = vmatpush1.msra.mxu0 0.0
    %306 = vmatprep.subr.mxu0 0.0
    %307 = vmatpush1.msra.mxu0 0.0
    %308 = vmatprep.subr.mxu0 0.0
    %309 = vmatpush1.msra.mxu0 0.0
    %310 = vmatprep.subr.mxu0 0.0
    %311 = vmatpush1.msra.mxu0 0.0
    %312 = vmatprep.subr.mxu0 0.0
    %313 = vmatpush1.msra.mxu0 0.0
    %314 = vmatprep.subr.mxu0 0.0
    %315 = vmatpush1.msra.mxu0 0.0
    %316 = vmatprep.subr.mxu0 0.0
    %317 = vmatpush1.msra.mxu0 0.0
    %318 = vmatprep.subr.mxu0 0.0
    %319 = vmatpush1.msra.mxu0 0.0
    %320 = vmatprep.subr.mxu0 0.0
    %321 = vmatpush1.msra.mxu0 0.0
    %322 = vmatprep.mubr.f32.mxu0 0.0
    %323 = vmatmul.mubr.f32.gmra.mrb[0].mxu0 %v253
    %v324 = vpop.f32.mrb[0].mxu0
    %v325 = vadd.f32 0.0, %v324
    %v326 = vpop.f32.mrb[0].mxu0
    %327 = vmatprep.mubr.f32.mxu0 0.0
    %328 = vmatmul.mubr.f32.gmra.mrb[0].mxu0 %v256
    %v329 = vpop.f32.mrb[0].mxu0
    %v330 = vadd.f32 0.0, %v329
    %v331 = vpop.f32.mrb[0].mxu0
    %332 = vdwg.mxu0
    %v333 = vlog2.pop %v325
    %v334 = vmul.f32 %v333, 0.6931472
    %v335 = vlog2.pop %v330
    %v336 = vmul.f32 %v335, 0.6931472
    %v337 = vsub.f32 %v334, %v40
    %v338 = vsub.f32 %v336, %v41
    %v339 = vmul.f32 %v250, %v337
    %v340 = vmul.f32 %v251, %v338
    %v341 = vsel %vm148, %v339, 0.0
    %v342 = vsel %vm148, %v340, 0.0
    %v343 = vadd.f32 %v341, %v342
    %344 = vadd.xlane.f32.xlu0 %v343
    %v345 = vpop.xlane.xlu0 %344
    %v346 = vrot.slane %v345, 4
    %v347 = vadd.f32 %v345, %v346
    %v348 = vrot.slane %v347, 2
    %v349 = vadd.f32 %v347, %v348
    %v350 = vrot.slane %v349, 1
    %v351 = vadd.f32 %v349, %v350
    %s352 = vtos %v351
    %v353 = vsel %vm148, %v250, 0.0
    %v354 = vsel %vm148, %v251, 0.0
    %v355 = vadd.f32 %v353, %v354
    %356 = vadd.xlane.f32.xlu0 %v355
    %v357 = vpop.xlane.xlu0 %356
    %v358 = vrot.slane %v357, 4
    %v359 = vadd.f32 %v357, %v358
    %v360 = vrot.slane %v359, 2
    %v361 = vadd.f32 %v359, %v360
    %v362 = vrot.slane %v361, 1
    %v363 = vadd.f32 %v361, %v362
    %s364 = vtos %v363
    %v366 = vsel %vm66, 1.0, 0
    %368 = vmatprep.subr.mxu0 0.0
    %369 = vmatpush1.msra.mxu0 %v42
    %370 = vmatprep.subr.mxu0 0.0
    %371 = vmatpush1.msra.mxu0 %v43
    %372 = vmatprep.subr.mxu0 0.0
    %373 = vmatpush1.msra.mxu0 0.0
    %374 = vmatprep.subr.mxu0 0.0
    %375 = vmatpush1.msra.mxu0 0.0
    %376 = vmatprep.subr.mxu0 0.0
    %377 = vmatpush1.msra.mxu0 0.0
    %378 = vmatprep.subr.mxu0 0.0
    %379 = vmatpush1.msra.mxu0 0.0
    %380 = vmatprep.subr.mxu0 0.0
    %381 = vmatpush1.msra.mxu0 0.0
    %382 = vmatprep.subr.mxu0 0.0
    %383 = vmatpush1.msra.mxu0 0.0
    %384 = vmatprep.subr.mxu0 0.0
    %385 = vmatpush1.msra.mxu0 0.0
    %386 = vmatprep.subr.mxu0 0.0
    %387 = vmatpush1.msra.mxu0 0.0
    %388 = vmatprep.subr.mxu0 0.0
    %389 = vmatpush1.msra.mxu0 0.0
    %390 = vmatprep.subr.mxu0 0.0
    %391 = vmatpush1.msra.mxu0 0.0
    %392 = vmatprep.subr.mxu0 0.0
    %393 = vmatpush1.msra.mxu0 0.0
    %394 = vmatprep.subr.mxu0 0.0
    %395 = vmatpush1.msra.mxu0 0.0
    %396 = vmatprep.subr.mxu0 0.0
    %397 = vmatpush1.msra.mxu0 0.0
    %398 = vmatprep.subr.mxu0 0.0
    %399 = vmatpush1.msra.mxu0 0.0
    %400 = vmatprep.subr.mxu0 0.0
    %401 = vmatpush1.msra.mxu0 0.0
    %402 = vmatprep.subr.mxu0 0.0
    %403 = vmatpush1.msra.mxu0 0.0
    %404 = vmatprep.subr.mxu0 0.0
    %405 = vmatpush1.msra.mxu0 0.0
    %406 = vmatprep.subr.mxu0 0.0
    %407 = vmatpush1.msra.mxu0 0.0
    %408 = vmatprep.subr.mxu0 0.0
    %409 = vmatpush1.msra.mxu0 0.0
    %410 = vmatprep.subr.mxu0 0.0
    %411 = vmatpush1.msra.mxu0 0.0
    %412 = vmatprep.subr.mxu0 0.0
    %413 = vmatpush1.msra.mxu0 0.0
    %414 = vmatprep.subr.mxu0 0.0
    %415 = vmatpush1.msra.mxu0 0.0
    %416 = vmatprep.subr.mxu0 0.0
    %417 = vmatpush1.msra.mxu0 0.0
    %418 = vmatprep.subr.mxu0 0.0
    %419 = vmatpush1.msra.mxu0 0.0
    %420 = vmatprep.subr.mxu0 0.0
    %421 = vmatpush1.msra.mxu0 0.0
    %422 = vmatprep.subr.mxu0 0.0
    %423 = vmatpush1.msra.mxu0 0.0
    %424 = vmatprep.subr.mxu0 0.0
    %425 = vmatpush1.msra.mxu0 0.0
    %426 = vmatprep.subr.mxu0 0.0
    %427 = vmatpush1.msra.mxu0 0.0
    %428 = vmatprep.subr.mxu0 0.0
    %429 = vmatpush1.msra.mxu0 0.0
    %430 = vmatprep.subr.mxu0 0.0
    %431 = vmatpush1.msra.mxu0 0.0
    %432 = vmatprep.mubr.f32.mxu0 0.0
    %433 = vmatmul.mubr.f32.gmra.mrb[0].mxu0 %v366
    %v434 = vpop.f32.mrb[0].mxu0
    %v435 = vadd.f32 0.0, %v434
    %v436 = vpop.f32.mrb[0].mxu0
    %437 = vdwg.mxu0
    %438 = vmatprep.subr.mxu0 0.0
    %439 = vmatpush1.msra.mxu0 %v162
    %440 = vmatprep.subr.mxu0 0.0
    %441 = vmatpush1.msra.mxu0 %v164
    %442 = vmatprep.subr.mxu0 0.0
    %443 = vmatpush1.msra.mxu0 0.0
    %444 = vmatprep.subr.mxu0 0.0
    %445 = vmatpush1.msra.mxu0 0.0
    %446 = vmatprep.subr.mxu0 0.0
    %447 = vmatpush1.msra.mxu0 0.0
    %448 = vmatprep.subr.mxu0 0.0
    %449 = vmatpush1.msra.mxu0 0.0
    %450 = vmatprep.subr.mxu0 0.0
    %451 = vmatpush1.msra.mxu0 0.0
    %452 = vmatprep.subr.mxu0 0.0
    %453 = vmatpush1.msra.mxu0 0.0
    %454 = vmatprep.subr.mxu0 0.0
    %455 = vmatpush1.msra.mxu0 0.0
    %456 = vmatprep.subr.mxu0 0.0
    %457 = vmatpush1.msra.mxu0 0.0
    %458 = vmatprep.subr.mxu0 0.0
    %459 = vmatpush1.msra.mxu0 0.0
    %460 = vmatprep.subr.mxu0 0.0
    %461 = vmatpush1.msra.mxu0 0.0
    %462 = vmatprep.subr.mxu0 0.0
    %463 = vmatpush1.msra.mxu0 0.0
    %464 = vmatprep.subr.mxu0 0.0
    %465 = vmatpush1.msra.mxu0 0.0
    %466 = vmatprep.subr.mxu0 0.0
    %467 = vmatpush1.msra.mxu0 0.0
    %468 = vmatprep.subr.mxu0 0.0
    %469 = vmatpush1.msra.mxu0 0.0
    %470 = vmatprep.subr.mxu0 0.0
    %471 = vmatpush1.msra.mxu0 0.0
    %472 = vmatprep.subr.mxu0 0.0
    %473 = vmatpush1.msra.mxu0 0.0
    %474 = vmatprep.subr.mxu0 0.0
    %475 = vmatpush1.msra.mxu0 0.0
    %476 = vmatprep.subr.mxu0 0.0
    %477 = vmatpush1.msra.mxu0 0.0
    %478 = vmatprep.subr.mxu0 0.0
    %479 = vmatpush1.msra.mxu0 0.0
    %480 = vmatprep.subr.mxu0 0.0
    %481 = vmatpush1.msra.mxu0 0.0
    %482 = vmatprep.subr.mxu0 0.0
    %483 = vmatpush1.msra.mxu0 0.0
    %484 = vmatprep.subr.mxu0 0.0
    %485 = vmatpush1.msra.mxu0 0.0
    %486 = vmatprep.subr.mxu0 0.0
    %487 = vmatpush1.msra.mxu0 0.0
    %488 = vmatprep.subr.mxu0 0.0
    %489 = vmatpush1.msra.mxu0 0.0
    %490 = vmatprep.subr.mxu0 0.0
    %491 = vmatpush1.msra.mxu0 0.0
    %492 = vmatprep.subr.mxu0 0.0
    %493 = vmatpush1.msra.mxu0 0.0
    %494 = vmatprep.subr.mxu0 0.0
    %495 = vmatpush1.msra.mxu0 0.0
    %496 = vmatprep.subr.mxu0 0.0
    %497 = vmatpush1.msra.mxu0 0.0
    %498 = vmatprep.subr.mxu0 0.0
    %499 = vmatpush1.msra.mxu0 0.0
    %500 = vmatprep.subr.mxu0 0.0
    %501 = vmatpush1.msra.mxu0 0.0
    %502 = vmatprep.mubr.f32.mxu0 0.0
    %503 = vmatmul.mubr.f32.gmra.mrb[0].mxu0 %v366
    %v504 = vpop.f32.mrb[0].mxu0
    %v505 = vadd.f32 0.0, %v504
    %v506 = vpop.f32.mrb[0].mxu0
    %507 = vdwg.mxu0
    %p508 = scmp.eq.s32.totalorder 0, 0
    // Predicated region
    $region18: #{tpu_custom_call.1} parent=1 // pred_check
      %p509 = pneg %p508
    $region19: #{tpu_custom_call.1} parent=1 // pred_check_branch
      %511 = sbr.rel (%p509) target = $region21
    $region20: #{tpu_custom_call.1} parent=1 // pred_region
      %s512 = scalar_lea.smem [#allocation2], 0
      %513 = sst [smem:[%s512]] 0.0
      %s514 = scalar_lea.smem [#allocation2], 1
      %515 = sst [smem:[%s514]] 0.0
      %s516 = scalar_lea.smem [#allocation2], 2
      %517 = sst [smem:[%s516]] 0.0
      %vm518 = vcmask 122880
      %519 = vst.msk [vmem:[#allocation3] sm:$0x1] %vm518, 0.0
      %520 = vst.msk [vmem:[#allocation4] sm:$0x1] %vm518, 0.0
      %521 = vst.msk [vmem:[#allocation5] sm:$0x1] %vm518, %v40
    $region21: #{tpu_custom_call.1} parent=1 // pred_fallthru
      _
    %s522 = sld [smem:[#allocation2]]
    %s523 = sadd.f32 %s522, %s160
    %s524 = scalar_lea.smem [#allocation2], 0
    %525 = sst [smem:[%s524]] %s523
    %s526 = sld [smem:[#allocation2 + $0x1]]
    %s527 = sadd.f32 %s526, %s352
    %s528 = scalar_lea.smem [#allocation2], 1
    %529 = sst [smem:[%s528]] %s527
    %s530 = sld [smem:[#allocation2 + $0x2]]
    %s531 = sadd.f32 %s530, %s364
    %s532 = scalar_lea.smem [#allocation2], 2
    %533 = sst [smem:[%s532]] %s531
    %v534 = vld [vmem:[#allocation3] sm:$0x1]
    %v535 = vadd.f32 %v534, %v435
    %vm536 = vcmask 122880
    %537 = vst.msk [vmem:[#allocation3] sm:$0x1] %vm536, %v535
    %v538 = vld [vmem:[#allocation4] sm:$0x1]
    %v539 = vadd.f32 %v538, %v505
    %540 = vst.msk [vmem:[#allocation4] sm:$0x1] %vm536, %v539
    // Predicated region
    $region22: #{tpu_custom_call.1} parent=1 // pred_check
      %p541 = pneg %p508
    $region23: #{tpu_custom_call.1} parent=1 // pred_check_branch
      %543 = sbr.rel (%p541) target = $region25
    $region24: #{tpu_custom_call.1} parent=1 // pred_region
      %s544 = sld [smem:[#allocation2]]
      %s545 = smul.f32 %s544, 0.00390625
      %s546 = sld [smem:[#allocation2 + $0x2]]
      %s547 = sld [smem:[#allocation2 + $0x1]]
      %s548 = smax.f32 %s546, 1.0
      %v549 = vstv %s548
      %v550 = vrcp.pop %v549
      %s551 = vtos %v550
      %s552 = smul.f32 %s547, %s551
      %p553 = scmp.gt.f32.partialorder %s546, 0.0
      %s554 = scalar_select %p553, %s552, 0.0
      %s555 = sadd.f32 %s545, %s554
      %v556 = vld [vmem:[#allocation3] sm:$0x1]
      %vm557 = vcmp.eq.f32.partialorder %v556, 0.0
      %v558 = vsel %vm557, 1, 0
      %v559 = vcvt.s32.f32 %v558
      %v560 = vld [vmem:[#allocation4] sm:$0x1]
      %v561 = vlog2.pop %v560
      %v562 = vmul.f32 %v561, 0.6931472
      %v563 = vld [vmem:[#allocation5] sm:$0x1]
      %v564 = vsub.f32 %v562, %v563
      %v565 = vsel %vm536, %v559, 0.0
      %566 = vadd.xlane.f32.xlu0 %v565
      %v567 = vpop.xlane.xlu0 %566
      %v568 = vrot.slane %v567, 4
      %v569 = vadd.f32 %v567, %v568
      %v570 = vrot.slane %v569, 2
      %v571 = vadd.f32 %v569, %v570
      %v572 = vrot.slane %v571, 1
      %v573 = vadd.f32 %v571, %v572
      %s574 = vtos %v573
      %v575 = vmul.f32 %v559, %v564
      %v576 = vsel %vm536, %v575, 0.0
      %577 = vadd.xlane.f32.xlu0 %v576
      %v578 = vpop.xlane.xlu0 %577
      %v579 = vrot.slane %v578, 4
      %v580 = vadd.f32 %v578, %v579
      %v581 = vrot.slane %v580, 2
      %v582 = vadd.f32 %v580, %v581
      %v583 = vrot.slane %v582, 1
      %v584 = vadd.f32 %v582, %v583
      %s585 = vtos %v584
      %s586 = smax.f32 %s574, 1.0
      %v587 = vstv %s586
      %v588 = vrcp.pop %v587
      %s589 = vtos %v588
      %s590 = smul.f32 %s585, %s589
      %p591 = scmp.gt.f32.partialorder %s574, 0.0
      %s592 = scalar_select %p591, %s590, 0.0
      %s593 = sadd.f32 %s555, %s592
      %s594 = scalar_lea.smem [#allocation11], 0
      %595 = sst [smem:[%s594]] %s593
    $region25: #{tpu_custom_call.1} parent=1 // pred_fallthru
      _
    // Predicated region
    $region26: #{tpu_custom_call.1} parent=1 // pred_check
      _
    $region27: #{tpu_custom_call.1} parent=1 // pred_check_branch
      %597 = sbr.rel (0) target = $region29
    $region28: #{tpu_custom_call.1} parent=1 // pred_region
      %s599 = ssub.s32 16, 16
      %600 = vsyncadd [#allocation8], %s599
      %603 = dma.smem_to_hbm [#allocation11], 16, %s2, [#allocation8]
    $region29: #{tpu_custom_call.1} parent=1 // pred_fallthru
      _
    // Predicated region
    $region30: #{tpu_custom_call.1} parent=1 // pred_check
      _
    $region31: #{tpu_custom_call.1} parent=1 // pred_check_branch
      %605 = sbr.rel (0) target = $region33
    $region32: #{tpu_custom_call.1} parent=1 // pred_region
      %606 = dma.done [#allocation8], 16
    $region33: #{tpu_custom_call.1} parent=1 // pred_fallthru
      _
    %607 = sfence
    %608 = vsyncpa [#allocation7], 1
    %609 = vsyncpa [#allocation10], 1
    %610 = vsyncpa [#allocation8], 1

</llo_original>
